<compile_context>
chip_gen: v5e
topology: v5e:2x2
jax: 0.10.0
libtpu: 0.0.40
codegen_flags: <defaults>
</compile_context>

<pallas_src>
import jax
import jax.numpy as jnp
from jax.experimental import pallas as pl
from jax.experimental.pallas import tpu as pltpu


def _round_up(x, m):
    return ((x + m - 1) // m) * m


def _mlp_kernel(x_ref, w1_ref, b1_ref, w2_ref, b2_ref, out_ref):
    # Cast the streamed x tile to the weight compute dtype inside the kernel
    # (the VPU cast hides under the tile DMA; no-op for the f32 path).
    x = x_ref[...].astype(w1_ref.dtype)
    # fc1 on the MXU, f32 accumulation.
    h = jnp.dot(x, w1_ref[...], preferred_element_type=jnp.float32)
    # Bias + ReLU epilogue in f32 on the VPU.
    h = jnp.maximum(h + b1_ref[...], 0.0)
    # fc2: re-cast activations to the compute dtype (documented extra bf16
    # truncation vs. the PyTorch f32 reference), accumulate in f32.
    q = jnp.dot(h.astype(w2_ref.dtype), w2_ref[...],
                preferred_element_type=jnp.float32)
    out_ref[...] = (q + b2_ref[...]).astype(out_ref.dtype)


def prepare_params(params, compute_dtype=jnp.float32):
    """One-time relayout of the PyTorch nn.Linear params for the kernel.

    - transposes weights to [in, out]
    - pads hidden and action dims up to multiples of 128 (lane-dense layout,
      unmasked vst); padded columns/rows are zero so they change nothing
      (ReLU(0) = 0 and zero fc2 rows contribute nothing)
    - biases become [1, out] f32 rows (f32 epilogue)
    - weights cast to compute_dtype. bf16 is recommended on ALL generations
      (v5e/v6e/v7x): the MXU runs bf16 natively everywhere and the epilogue
      stays f32, so v5e's missing bf16 VPU path does not matter.
    """
    hl_size, input_size = params["fc1_w"].shape
    nb_action = params["fc2_w"].shape[0]
    hl_pad = _round_up(hl_size, 128)
    na_pad = _round_up(nb_action, 128)

    w1 = jnp.zeros((input_size, hl_pad), compute_dtype)
    w1 = w1.at[:, :hl_size].set(params["fc1_w"].T.astype(compute_dtype))
    b1 = jnp.zeros((1, hl_pad), jnp.float32)
    b1 = b1.at[:, :hl_size].set(params["fc1_b"].astype(jnp.float32)[None, :])
    w2 = jnp.zeros((hl_pad, na_pad), compute_dtype)
    w2 = w2.at[:hl_size, :nb_action].set(params["fc2_w"].T.astype(compute_dtype))
    b2 = jnp.zeros((1, na_pad), jnp.float32)
    b2 = b2.at[:, :nb_action].set(params["fc2_b"].astype(jnp.float32)[None, :])

    return {
        "w1": w1, "b1": b1, "w2": w2, "b2": b2,
        "input_size": input_size, "hl_size": hl_size, "nb_action": nb_action,
        "compute_dtype": compute_dtype,
    }


def network_forward(state, prepared, *, batch_tile=1024, out_dtype=None,
                    slice_output=True):
    """Pallas implementation of Network.forward.

    state: [B, input_size] (any float dtype; cast to compute dtype in-kernel)
    prepared: output of prepare_params()
    out_dtype: output dtype; defaults to the compute dtype (bf16 output halves
               HBM writeback when compute is bf16)
    slice_output: if False, return the padded (b_pad, na_pad) array and let
                  the consumer slice lazily (skips an output-sized HBM pass)
    """
    B, input_size = state.shape
    assert input_size == prepared["w1"].shape[0]
    hl_pad = prepared["w1"].shape[1]
    na_pad = prepared["w2"].shape[1]
    nb_action = prepared["nb_action"]
    compute_dtype = jnp.dtype(prepared["compute_dtype"])
    out_dtype = compute_dtype if out_dtype is None else jnp.dtype(out_dtype)

    # Sublane multiple: 8 rows/vreg for 32-bit, 16 for bf16, 32 for 8-bit.
    sub = {1: 32, 2: 16}.get(compute_dtype.itemsize, 8)

    tb = min(batch_tile, _round_up(B, sub))
    # v7x has 2 TensorCores per chip: guarantee >= 2 grid steps on the
    # "parallel" batch axis when B is big enough (free on 1-TC v5e/v6e).
    if B >= 2 * sub and _round_up(B, tb) // tb < 2:
        tb = _round_up(-(-B // 2), sub)
    b_pad = _round_up(B, tb)

    x = state
    if b_pad != B:
        # Zero rows are exact no-ops and get sliced off (or ignored) below.
        x = jnp.pad(x, ((0, b_pad - B), (0, 0)))

    x_item = jnp.dtype(x.dtype).itemsize
    c_item = compute_dtype.itemsize
    o_item = out_dtype.itemsize

    flops = 2 * b_pad * (input_size * hl_pad + hl_pad * na_pad)
    bytes_accessed = (b_pad * input_size * x_item                       # x
                      + (input_size * hl_pad + hl_pad * na_pad) * c_item  # w1,w2
                      + (hl_pad + na_pad) * 4                           # biases
                      + b_pad * na_pad * o_item)                        # q out

    # VMEM budget: streamed x/out tiles (double-buffered) + resident weights
    # (counted double-buffered to stay conservative) + f32 h intermediate,
    # with 25% headroom.  Floor at 32 MiB, cap at 48 MiB (safe on v7x's
    # 64 MiB physical VMEM; v5e/v6e have 128 MiB).
    weight_bytes = ((input_size * hl_pad + hl_pad * na_pad) * c_item
                    + (hl_pad + na_pad) * 4)
    needed_vmem = (2 * tb * (input_size * x_item + na_pad * o_item)
                   + 2 * weight_bytes
                   + tb * hl_pad * 4)
    vmem_limit = int(min(max(needed_vmem * 1.25, 32 * 1024 * 1024),
                         48 * 1024 * 1024))

    def build(single_buffer_weights):
        # Constant-index (resident) blocks do not need double buffers:
        # single-buffering halves their VMEM footprint (matters on v7x).
        res_kw = ({"pipeline_mode": pl.Buffered(1)}
                  if single_buffer_weights else {})
        return pl.pallas_call(
            _mlp_kernel,
            out_shape=jax.ShapeDtypeStruct((b_pad, na_pad), out_dtype),
            grid=(b_pad // tb,),
            in_specs=[
                pl.BlockSpec((tb, input_size), lambda i: (i, 0)),       # x tile
                pl.BlockSpec((input_size, hl_pad), lambda i: (0, 0), **res_kw),
                pl.BlockSpec((1, hl_pad), lambda i: (0, 0), **res_kw),
                pl.BlockSpec((hl_pad, na_pad), lambda i: (0, 0), **res_kw),
                pl.BlockSpec((1, na_pad), lambda i: (0, 0), **res_kw),
            ],
            out_specs=pl.BlockSpec((tb, na_pad), lambda i: (i, 0)),     # q tile
            compiler_params=pltpu.CompilerParams(
                dimension_semantics=("parallel",),
                vmem_limit_bytes=vmem_limit,
            ),
            cost_estimate=pl.CostEstimate(
                flops=flops, transcendentals=0, bytes_accessed=bytes_accessed),
        )

    args = (x, prepared["w1"], prepared["b1"], prepared["w2"], prepared["b2"])
    try:
        out = build(True)(*args)
    except Exception:
        # Fallback if this jax/Mosaic build rejects single-buffered blocks.
        out = build(False)(*args)

    if slice_output:
        # NOTE: this slice is an extra output-sized HBM pass; latency-critical
        # consumers should pass slice_output=False and slice lazily downstream.
        out = out[:B, :nb_action]
    return out


def init_params(key, input_size, hl_size, nb_action):
    """Deterministic init mimicking PyTorch nn.Linear default
    (uniform in [-1/sqrt(fan_in), 1/sqrt(fan_in)])."""
    k1, k2, k3, k4 = jax.random.split(key, 4)
    bound1 = 1.0 / (input_size ** 0.5)
    bound2 = 1.0 / (hl_size ** 0.5)
    return {
        "fc1_w": jax.random.uniform(k1, (hl_size, input_size), jnp.float32,
                                    -bound1, bound1),
        "fc1_b": jax.random.uniform(k2, (hl_size,), jnp.float32, -bound1, bound1),
        "fc2_w": jax.random.uniform(k3, (nb_action, hl_size), jnp.float32,
                                    -bound2, bound2),
        "fc2_b": jax.random.uniform(k4, (nb_action,), jnp.float32, -bound2, bound2),
    }


if __name__ == "__main__":
    # Small shapes consistent with the module: state [B, input_size]
    B, input_size, hl_size, nb_action = 2, 8, 32, 4

    key = jax.random.PRNGKey(0)
    kx, kp = jax.random.split(key)
    state = jax.random.normal(kx, (B, input_size), jnp.float32)
    params = init_params(kp, input_size, hl_size, nb_action)

    # Pure-JAX reference of the same forward pass.
    h_ref = jnp.maximum(state @ params["fc1_w"].T + params["fc1_b"], 0.0)
    q_ref = h_ref @ params["fc2_w"].T + params["fc2_b"]

    # f32 compute path (exact match to reference, f32 output).
    prep_f32 = prepare_params(params, jnp.float32)
    q_f32 = jax.block_until_ready(network_forward(state, prep_f32))
    assert q_f32.shape == (B, nb_action)
    assert q_f32.dtype == jnp.float32
    assert jnp.allclose(q_f32, q_ref, atol=1e-5, rtol=1e-5)

    # bf16 MXU path (recommended on v5e/v6e/v7x); f32 accumulation + f32
    # epilogue, bf16 output (halves writeback).  Documented tradeoff: the
    # post-ReLU activation and the output carry bf16 truncation.
    prep_bf16 = prepare_params(params, jnp.bfloat16)
    q_bf16 = jax.block_until_ready(network_forward(state, prep_bf16))
    assert q_bf16.shape == (B, nb_action)
    assert q_bf16.dtype == jnp.bfloat16
    assert jnp.allclose(q_bf16.astype(jnp.float32), q_ref, atol=5e-2, rtol=5e-2)

    # Padded-output path (no trailing slice pass), f32 output on bf16 compute.
    q_pad = jax.block_until_ready(
        network_forward(state, prep_bf16, out_dtype=jnp.float32,
                        slice_output=False))
    assert q_pad.shape[1] % 128 == 0
    assert jnp.allclose(q_pad[:B, :nb_action], q_ref, atol=5e-2, rtol=5e-2)

    print("KERNEL_OK")
</pallas_src>

<mosaic_0001>
module attributes {stable_mosaic.version = 11 : i64} {
  func.func @_mlp_kernel(%arg0: i32, %arg1: memref<8x8xf32, #tpu.memory_space<vmem>>, %arg2: memref<8x128xf32, #tpu.memory_space<vmem>>, %arg3: memref<1x128xf32, #tpu.memory_space<vmem>>, %arg4: memref<128x128xf32, #tpu.memory_space<vmem>>, %arg5: memref<1x128xf32, #tpu.memory_space<vmem>>, %arg6: memref<8x128xf32, #tpu.memory_space<vmem>>) attributes {dimension_semantics = [#tpu.dimension_semantics<parallel>], iteration_bounds = array<i64: 1>, scalar_prefetch = 0 : i64, scratch_operands = 0 : i64, tpu.core_type = #tpu.core_type<tc>, window_params = [{transform_indices = @transform_0, window_bounds = array<i64: 8, 8>}, {pipeline_mode = #tpu.pipeline_mode<synchronous>, transform_indices = @transform_1, window_bounds = array<i64: 8, 128>}, {pipeline_mode = #tpu.pipeline_mode<synchronous>, transform_indices = @transform_2, window_bounds = array<i64: 1, 128>}, {pipeline_mode = #tpu.pipeline_mode<synchronous>, transform_indices = @transform_3, window_bounds = array<i64: 128, 128>}, {pipeline_mode = #tpu.pipeline_mode<synchronous>, transform_indices = @transform_4, window_bounds = array<i64: 1, 128>}, {transform_indices = @transform_5, window_bounds = array<i64: 8, 128>}]} {
    %c0 = arith.constant 0 : index
    %c0_0 = arith.constant 0 : index
    %0 = vector.load %arg1[%c0, %c0_0] : memref<8x8xf32, #tpu.memory_space<vmem>>, vector<8x8xf32>
    %c0_1 = arith.constant 0 : index
    %c0_2 = arith.constant 0 : index
    %1 = vector.load %arg2[%c0_1, %c0_2] : memref<8x128xf32, #tpu.memory_space<vmem>>, vector<8x128xf32>
    %cst = arith.constant dense<0.000000e+00> : vector<8x128xf32>
    %2 = tpu.matmul %0, %1, %cst {dimension_numbers = #tpu.dot_dimension_numbers<[1], [0], [0], [1], [0, 0, 1, 1], [], []>} : vector<8x8xf32>, vector<8x128xf32>, vector<8x128xf32> -> vector<8x128xf32>
    %c0_3 = arith.constant 0 : index
    %c0_4 = arith.constant 0 : index
    %3 = vector.load %arg3[%c0_3, %c0_4] : memref<1x128xf32, #tpu.memory_space<vmem>>, vector<1x128xf32>
    %4 = vector.broadcast %3 : vector<1x128xf32> to vector<8x128xf32>
    %5 = arith.addf %2, %4 : vector<8x128xf32>
    %cst_5 = arith.constant 0.000000e+00 : f32
    %6 = vector.broadcast %cst_5 : f32 to vector<8x128xf32>
    %7 = arith.maximumf %5, %6 : vector<8x128xf32>
    %c0_6 = arith.constant 0 : index
    %c0_7 = arith.constant 0 : index
    %8 = vector.load %arg4[%c0_6, %c0_7] : memref<128x128xf32, #tpu.memory_space<vmem>>, vector<128x128xf32>
    %cst_8 = arith.constant dense<0.000000e+00> : vector<8x128xf32>
    %9 = tpu.matmul %7, %8, %cst_8 {dimension_numbers = #tpu.dot_dimension_numbers<[1], [0], [0], [1], [0, 0, 1, 1], [], []>} : vector<8x128xf32>, vector<128x128xf32>, vector<8x128xf32> -> vector<8x128xf32>
    %c0_9 = arith.constant 0 : index
    %c0_10 = arith.constant 0 : index
    %10 = vector.load %arg5[%c0_9, %c0_10] : memref<1x128xf32, #tpu.memory_space<vmem>>, vector<1x128xf32>
    %11 = vector.broadcast %10 : vector<1x128xf32> to vector<8x128xf32>
    %12 = arith.addf %9, %11 : vector<8x128xf32>
    %c0_11 = arith.constant 0 : index
    %c0_12 = arith.constant 0 : index
    %13 = vector.load %arg6[%c0_11, %c0_12] : memref<8x128xf32, #tpu.memory_space<vmem>>, vector<8x128xf32>
    tpu.vector_store %arg6[%c0_11, %c0_12], %12 {strides = array<i32>} : memref<8x128xf32, #tpu.memory_space<vmem>>, vector<8x128xf32>,
    return
  }
  func.func @transform_0(%arg0: i32) -> (i32, i32) {
    %c0_i32 = arith.constant 0 : i32
    %c0_i32_0 = arith.constant 0 : i32
    return %arg0, %c0_i32 : i32, i32
  }
  func.func @transform_1(%arg0: i32) -> (i32, i32) {
    %c0_i32 = arith.constant 0 : i32
    %c0_i32_0 = arith.constant 0 : i32
    %c0_i32_1 = arith.constant 0 : i32
    return %c0_i32, %c0_i32_0 : i32, i32
  }
  func.func @transform_2(%arg0: i32) -> (i32, i32) {
    %c0_i32 = arith.constant 0 : i32
    %c0_i32_0 = arith.constant 0 : i32
    %c0_i32_1 = arith.constant 0 : i32
    return %c0_i32, %c0_i32_0 : i32, i32
  }
  func.func @transform_3(%arg0: i32) -> (i32, i32) {
    %c0_i32 = arith.constant 0 : i32
    %c0_i32_0 = arith.constant 0 : i32
    %c0_i32_1 = arith.constant 0 : i32
    return %c0_i32, %c0_i32_0 : i32, i32
  }
  func.func @transform_4(%arg0: i32) -> (i32, i32) {
    %c0_i32 = arith.constant 0 : i32
    %c0_i32_0 = arith.constant 0 : i32
    %c0_i32_1 = arith.constant 0 : i32
    return %c0_i32, %c0_i32_0 : i32, i32
  }
  func.func @transform_5(%arg0: i32) -> (i32, i32) {
    %c0_i32 = arith.constant 0 : i32
    %c0_i32_0 = arith.constant 0 : i32
    return %arg0, %c0_i32 : i32, i32
  }
}

module attributes {stable_mosaic.version = 11 : i64} {
  func.func @_mlp_kernel(%arg0: i32, %arg1: memref<8x8xf32, #tpu.memory_space<vmem>>, %arg2: memref<8x128xf32, #tpu.memory_space<vmem>>, %arg3: memref<1x128xf32, #tpu.memory_space<vmem>>, %arg4: memref<128x128xf32, #tpu.memory_space<vmem>>, %arg5: memref<1x128xf32, #tpu.memory_space<vmem>>, %arg6: memref<8x128xf32, #tpu.memory_space<vmem>>) attributes {dimension_semantics = [#tpu.dimension_semantics<parallel>], iteration_bounds = array<i64: 1>, scalar_prefetch = 0 : i64, scratch_operands = 0 : i64, tpu.core_type = #tpu.core_type<tc>, window_params = [{transform_indices = @transform_0, window_bounds = array<i64: 8, 8>}, {pipeline_mode = #tpu.pipeline_mode<synchronous>, transform_indices = @transform_1, window_bounds = array<i64: 8, 128>}, {pipeline_mode = #tpu.pipeline_mode<synchronous>, transform_indices = @transform_2, window_bounds = array<i64: 1, 128>}, {pipeline_mode = #tpu.pipeline_mode<synchronous>, transform_indices = @transform_3, window_bounds = array<i64: 128, 128>}, {pipeline_mode = #tpu.pipeline_mode<synchronous>, transform_indices = @transform_4, window_bounds = array<i64: 1, 128>}, {transform_indices = @transform_5, window_bounds = array<i64: 8, 128>}]} {
    %c0 = arith.constant 0 : index
    %c0_0 = arith.constant 0 : index
    %0 = vector.load %arg1[%c0, %c0_0] : memref<8x8xf32, #tpu.memory_space<vmem>>, vector<8x8xf32>
    %c0_1 = arith.constant 0 : index
    %c0_2 = arith.constant 0 : index
    %1 = vector.load %arg2[%c0_1, %c0_2] : memref<8x128xf32, #tpu.memory_space<vmem>>, vector<8x128xf32>
    %cst = arith.constant dense<0.000000e+00> : vector<8x128xf32>
    %2 = tpu.matmul %0, %1, %cst {dimension_numbers = #tpu.dot_dimension_numbers<[1], [0], [0], [1], [0, 0, 1, 1], [], []>} : vector<8x8xf32>, vector<8x128xf32>, vector<8x128xf32> -> vector<8x128xf32>
    %c0_3 = arith.constant 0 : index
    %c0_4 = arith.constant 0 : index
    %3 = vector.load %arg3[%c0_3, %c0_4] : memref<1x128xf32, #tpu.memory_space<vmem>>, vector<1x128xf32>
    %4 = vector.broadcast %3 : vector<1x128xf32> to vector<8x128xf32>
    %5 = arith.addf %2, %4 : vector<8x128xf32>
    %cst_5 = arith.constant 0.000000e+00 : f32
    %6 = vector.broadcast %cst_5 : f32 to vector<8x128xf32>
    %7 = arith.maximumf %5, %6 : vector<8x128xf32>
    %c0_6 = arith.constant 0 : index
    %c0_7 = arith.constant 0 : index
    %8 = vector.load %arg4[%c0_6, %c0_7] : memref<128x128xf32, #tpu.memory_space<vmem>>, vector<128x128xf32>
    %cst_8 = arith.constant dense<0.000000e+00> : vector<8x128xf32>
    %9 = tpu.matmul %7, %8, %cst_8 {dimension_numbers = #tpu.dot_dimension_numbers<[1], [0], [0], [1], [0, 0, 1, 1], [], []>} : vector<8x128xf32>, vector<128x128xf32>, vector<8x128xf32> -> vector<8x128xf32>
    %c0_9 = arith.constant 0 : index
    %c0_10 = arith.constant 0 : index
    %10 = vector.load %arg5[%c0_9, %c0_10] : memref<1x128xf32, #tpu.memory_space<vmem>>, vector<1x128xf32>
    %11 = vector.broadcast %10 : vector<1x128xf32> to vector<8x128xf32>
    %12 = arith.addf %9, %11 : vector<8x128xf32>
    %c0_11 = arith.constant 0 : index
    %c0_12 = arith.constant 0 : index
    %13 = vector.load %arg6[%c0_11, %c0_12] : memref<8x128xf32, #tpu.memory_space<vmem>>, vector<8x128xf32>
    tpu.vector_store %arg6[%c0_11, %c0_12], %12 {strides = array<i32>} : memref<8x128xf32, #tpu.memory_space<vmem>>, vector<8x128xf32>,
    return
  }
  func.func @transform_0(%arg0: i32) -> (i32, i32) {
    %c0_i32 = arith.constant 0 : i32
    %c0_i32_0 = arith.constant 0 : i32
    return %arg0, %c0_i32 : i32, i32
  }
  func.func @transform_1(%arg0: i32) -> (i32, i32) {
    %c0_i32 = arith.constant 0 : i32
    %c0_i32_0 = arith.constant 0 : i32
    %c0_i32_1 = arith.constant 0 : i32
    return %c0_i32, %c0_i32_0 : i32, i32
  }
  func.func @transform_2(%arg0: i32) -> (i32, i32) {
    %c0_i32 = arith.constant 0 : i32
    %c0_i32_0 = arith.constant 0 : i32
    %c0_i32_1 = arith.constant 0 : i32
    return %c0_i32, %c0_i32_0 : i32, i32
  }
  func.func @transform_3(%arg0: i32) -> (i32, i32) {
    %c0_i32 = arith.constant 0 : i32
    %c0_i32_0 = arith.constant 0 : i32
    %c0_i32_1 = arith.constant 0 : i32
    return %c0_i32, %c0_i32_0 : i32, i32
  }
  func.func @transform_4(%arg0: i32) -> (i32, i32) {
    %c0_i32 = arith.constant 0 : i32
    %c0_i32_0 = arith.constant 0 : i32
    %c0_i32_1 = arith.constant 0 : i32
    return %c0_i32, %c0_i32_0 : i32, i32
  }
  func.func @transform_5(%arg0: i32) -> (i32, i32) {
    %c0_i32 = arith.constant 0 : i32
    %c0_i32_0 = arith.constant 0 : i32
    return %arg0, %c0_i32 : i32, i32
  }
}

</mosaic_0001>

<llo_original>
// kernel: tpu_custom_call.1
$region0: #{tpu_custom_call.1}
  #allocation0 [shape = 'u32[]', space=smem, size = 0x4, offset = 0x4, fixed_abs, tag = 'smem constant byte address 0x4 - core index']
  #allocation1 [shape = 'u32[72,128]{1,0:T(1,128)}', space=vmem, size = 0x9000, scoped, tag = 'internal scratch']
  %s0 = inlined_call_operand.hbm [shape: f32[8,8], index: 0, kind: input, shape index: {}]
  %s1 = inlined_call_operand.hbm [shape: f32[8,128], index: 1, kind: input, shape index: {}]
  %s2 = inlined_call_operand.vmem [shape: f32[1,128], index: 2, kind: input, shape index: {}]
  %s3 = inlined_call_operand.hbm [shape: f32[128,128], index: 3, kind: input, shape index: {}]
  %s4 = inlined_call_operand.vmem [shape: f32[1,128], index: 4, kind: input, shape index: {}]
  %s5 = inlined_call_operand.hbm [shape: f32[8,128], index: 5, kind: output, shape index: {}]
  %s6 = sld [smem:[#allocation0]]
  $region42: #{tpu_custom_call.1} parent=0
    _
  %s8 = ssub.s32 1, %s6
  %s9 = scalar_select 0, %s8, %s6
  $region1: #{tpu_custom_call.1} parent=0
    #allocation2 [shape = 'u8[4096]{0}', space=vmem, size = 0x1000, scoped, tag = 'input window, operand 0, single buffered']
    #allocation3 [shape = 's32[1]{0}', space=sflag, size = 0x4, scoped, tag = 'scoped memory for tpu_custom_call.1']
    #allocation4 [shape = 's32[1]{0}', space=sflag, size = 0x4, scoped, tag = 'scoped memory for tpu_custom_call.1']
    #allocation5 [shape = 'u8[4096]{0}', space=vmem, size = 0x1000, scoped, tag = 'input window, operand 1, single buffered']
    #allocation6 [shape = 's32[1]{0}', space=sflag, size = 0x4, scoped, tag = 'scoped memory for tpu_custom_call.1']
    #allocation7 [shape = 'u8[65536]{0}', space=vmem, size = 0x10000, scoped, tag = 'input window, operand 3, single buffered']
    #allocation8 [shape = 'u8[4096]{0}', space=vmem, size = 0x1000, scoped, tag = 'output window, operand 0, single buffered']
    %10 = vsyncpa [#allocation3], 0
    %11 = vsyncpa [#allocation6], 0
    %12 = vsyncpa [#allocation4], 0
    // Predicated region
    $region2: #{tpu_custom_call.1} parent=1 // pred_check
      _
    $region3: #{tpu_custom_call.1} parent=1 // pred_check_branch
      %14 = sbr.rel (0) target = $region5
    $region4: #{tpu_custom_call.1} parent=1 // pred_region
      %16 = vsyncadd [#allocation3], 0
      %s18 = sshll.u32 %s0, 4
      %s19 = int_to_ptr.hbm [resolvable:$true] %s18
      %s20 = sshll.u32 [#allocation2], 4
      %s21 = int_to_ptr.vmem [resolvable:$true] %s20
      %23 = dma.hbm_to_vmem [thread:$0]  %s19, 128, %s21, [#allocation3]
    $region5: #{tpu_custom_call.1} parent=1 // pred_fallthru
      _
    // Predicated region
    $region6: #{tpu_custom_call.1} parent=1 // pred_check
      _
    $region7: #{tpu_custom_call.1} parent=1 // pred_check_branch
      %25 = sbr.rel (0) target = $region9
    $region8: #{tpu_custom_call.1} parent=1 // pred_region
      %27 = vsyncadd [#allocation6], 0
      %s29 = sshll.u32 %s1, 4
      %s30 = int_to_ptr.hbm [resolvable:$true] %s29
      %s31 = sshll.u32 [#allocation5], 4
      %s32 = int_to_ptr.vmem [resolvable:$true] %s31
      %34 = dma.hbm_to_vmem [thread:$0]  %s30, 128, %s32, [#allocation6]
    $region9: #{tpu_custom_call.1} parent=1 // pred_fallthru
      _
    // Predicated region
    $region10: #{tpu_custom_call.1} parent=1 // pred_check
      _
    $region11: #{tpu_custom_call.1} parent=1 // pred_check_branch
      %36 = sbr.rel (0) target = $region13
    $region12: #{tpu_custom_call.1} parent=1 // pred_region
      _
    $region13: #{tpu_custom_call.1} parent=1 // pred_fallthru
      _
    // Predicated region
    $region14: #{tpu_custom_call.1} parent=1 // pred_check
      _
    $region15: #{tpu_custom_call.1} parent=1 // pred_check_branch
      %38 = sbr.rel (0) target = $region17
    $region16: #{tpu_custom_call.1} parent=1 // pred_region
      %40 = vsyncadd [#allocation6], 0
      %s41 = sshll.u32 %s3, 4
      %s42 = int_to_ptr.hbm [resolvable:$true] %s41
      %s43 = sshll.u32 [#allocation7], 4
      %s44 = int_to_ptr.vmem [resolvable:$true] %s43
      %49 = dma.hbm_to_vmem [thread:$0]  %s42, 2048, %s44, [#allocation6], 128, 128, 8
    $region17: #{tpu_custom_call.1} parent=1 // pred_fallthru
      _
    // Predicated region
    $region18: #{tpu_custom_call.1} parent=1 // pred_check
      _
    $region19: #{tpu_custom_call.1} parent=1 // pred_check_branch
      %51 = sbr.rel (0) target = $region21
    $region20: #{tpu_custom_call.1} parent=1 // pred_region
      _
    $region21: #{tpu_custom_call.1} parent=1 // pred_fallthru
      _
    // Predicated region
    $region22: #{tpu_custom_call.1} parent=1 // pred_check
      _
    $region23: #{tpu_custom_call.1} parent=1 // pred_check_branch
      %53 = sbr.rel (0) target = $region25
    $region24: #{tpu_custom_call.1} parent=1 // pred_region
      %55 = dma.done [#allocation3], 128
    $region25: #{tpu_custom_call.1} parent=1 // pred_fallthru
      _
    // Predicated region
    $region26: #{tpu_custom_call.1} parent=1 // pred_check
      _
    $region27: #{tpu_custom_call.1} parent=1 // pred_check_branch
      %57 = sbr.rel (0) target = $region29
    $region28: #{tpu_custom_call.1} parent=1 // pred_region
      %59 = dma.done [#allocation6], 128
    $region29: #{tpu_custom_call.1} parent=1 // pred_fallthru
      _
    // Predicated region
    $region30: #{tpu_custom_call.1} parent=1 // pred_check
      _
    $region31: #{tpu_custom_call.1} parent=1 // pred_check_branch
      %61 = sbr.rel (0) target = $region33
    $region32: #{tpu_custom_call.1} parent=1 // pred_region
      %63 = dma.done [#allocation6], 2048
    $region33: #{tpu_custom_call.1} parent=1 // pred_fallthru
      _
    %v64 = vld [vmem:[#allocation2] sm:$0xff]
    %v65 = vld [vmem:[#allocation5] sm:$0xff]
    %v66 = vld [vmem:[%s2] sm:$0x1]
    %v68 = vperm.slane %v66, 0
    %vm70 = vcmask 64512
    %v72 = vsel %vm70, %v64, 0
    %74 = vmatpush.msra.mxu0 0.0
    %75 = vmatpush.msra.mxu0 0.0
    %76 = vmatpush.msra.mxu0 0.0
    %77 = vmatpush.msra.mxu0 0.0
    %78 = vmatpush.msra.mxu0 0.0
    %79 = vmatpush.msra.mxu0 0.0
    %80 = vmatpush.msra.mxu0 0.0
    %81 = vmatpush.msra.mxu0 0.0
    %82 = vmatpush.msra.mxu0 0.0
    %83 = vmatpush.msra.mxu0 0.0
    %84 = vmatpush.msra.mxu0 0.0
    %85 = vmatpush.msra.mxu0 0.0
    %86 = vmatpush.msra.mxu0 0.0
    %87 = vmatpush.msra.mxu0 0.0
    %88 = vmatpush.msra.mxu0 0.0
    %89 = vmatpush.msra.mxu0 %v65
    %90 = vmatmul.f32.gmra.mxu0 %v72
    %v91 = vpop.f32.mrf.mxu0
    %v92 = vadd.f32 %v68, %v91
    %93 = vdwg.mxu0
    %v94 = vmax.f32 %v92, 0.0
    %v95 = vld [vmem:[#allocation7] sm:$0xff]
    %v96 = vld [vmem:[#allocation7 + $0x8] sm:$0xff]
    %v97 = vld [vmem:[#allocation7 + $0x10] sm:$0xff]
    %v98 = vld [vmem:[#allocation7 + $0x18] sm:$0xff]
    %v99 = vld [vmem:[#allocation7 + $0x20] sm:$0xff]
    %v100 = vld [vmem:[#allocation7 + $0x28] sm:$0xff]
    %v101 = vld [vmem:[#allocation7 + $0x30] sm:$0xff]
    %v102 = vld [vmem:[#allocation7 + $0x38] sm:$0xff]
    %v103 = vld [vmem:[#allocation7 + $0x40] sm:$0xff]
    %v104 = vld [vmem:[#allocation7 + $0x48] sm:$0xff]
    %v105 = vld [vmem:[#allocation7 + $0x50] sm:$0xff]
    %v106 = vld [vmem:[#allocation7 + $0x58] sm:$0xff]
    %v107 = vld [vmem:[#allocation7 + $0x60] sm:$0xff]
    %v108 = vld [vmem:[#allocation7 + $0x68] sm:$0xff]
    %v109 = vld [vmem:[#allocation7 + $0x70] sm:$0xff]
    %v110 = vld [vmem:[#allocation7 + $0x78] sm:$0xff]
    %v111 = vld [vmem:[%s4] sm:$0x1]
    %v113 = vperm.slane %v111, 0
    %115 = vmatpush.msra.mxu0 %v110
    %116 = vmatpush.msra.mxu0 %v109
    %117 = vmatpush.msra.mxu0 %v108
    %118 = vmatpush.msra.mxu0 %v107
    %119 = vmatpush.msra.mxu0 %v106
    %120 = vmatpush.msra.mxu0 %v105
    %121 = vmatpush.msra.mxu0 %v104
    %122 = vmatpush.msra.mxu0 %v103
    %123 = vmatpush.msra.mxu0 %v102
    %124 = vmatpush.msra.mxu0 %v101
    %125 = vmatpush.msra.mxu0 %v100
    %126 = vmatpush.msra.mxu0 %v99
    %127 = vmatpush.msra.mxu0 %v98
    %128 = vmatpush.msra.mxu0 %v97
    %129 = vmatpush.msra.mxu0 %v96
    %130 = vmatpush.msra.mxu0 %v95
    %131 = vmatmul.f32.gmra.mxu0 %v94
    %v132 = vpop.f32.mrf.mxu0
    %v133 = vadd.f32 %v113, %v132
    %134 = vdwg.mxu0
    %135 = vst [vmem:[#allocation8] sm:$0xff] %v133
    // Predicated region
    $region34: #{tpu_custom_call.1} parent=1 // pred_check
      _
    $region35: #{tpu_custom_call.1} parent=1 // pred_check_branch
      %137 = sbr.rel (0) target = $region37
    $region36: #{tpu_custom_call.1} parent=1 // pred_region
      %139 = vsyncadd [#allocation4], 0
      %s141 = sshll.u32 [#allocation8], 4
      %s142 = int_to_ptr.vmem [resolvable:$true] %s141
      %s143 = sshll.u32 %s5, 4
      %s144 = int_to_ptr.hbm [resolvable:$true] %s143
      %146 = dma.vmem_to_hbm [thread:$0]  %s142, 128, %s144, [#allocation4]
    $region37: #{tpu_custom_call.1} parent=1 // pred_fallthru
      _
    // Predicated region
    $region38: #{tpu_custom_call.1} parent=1 // pred_check
      _
    $region39: #{tpu_custom_call.1} parent=1 // pred_check_branch
      %148 = sbr.rel (0) target = $region41
    $region40: #{tpu_custom_call.1} parent=1 // pred_region
      %150 = dma.done [#allocation4], 128
    $region41: #{tpu_custom_call.1} parent=1 // pred_fallthru
      _
    %151 = vsyncpa [#allocation3], 1
    %152 = vsyncpa [#allocation6], 1
    %153 = vsyncpa [#allocation4], 1

// kernel: tpu_custom_call.1
$region0: #{tpu_custom_call.1}
  #allocation0 [shape = 'u32[]', space=smem, size = 0x4, offset = 0x4, fixed_abs, tag = 'smem constant byte address 0x4 - core index']
  #allocation1 [shape = 'u32[72,128]{1,0:T(1,128)}', space=vmem, size = 0x9000, scoped, tag = 'internal scratch']
  %s0 = inlined_call_operand.hbm [shape: f32[8,8], index: 0, kind: input, shape index: {}]
  %s1 = inlined_call_operand.hbm [shape: f32[8,128], index: 1, kind: input, shape index: {}]
  %s2 = inlined_call_operand.vmem [shape: f32[1,128], index: 2, kind: input, shape index: {}]
  %s3 = inlined_call_operand.hbm [shape: f32[128,128], index: 3, kind: input, shape index: {}]
  %s4 = inlined_call_operand.vmem [shape: f32[1,128], index: 4, kind: input, shape index: {}]
  %s5 = inlined_call_operand.hbm [shape: f32[8,128], index: 5, kind: output, shape index: {}]
  %s6 = sld [smem:[#allocation0]]
  $region42: #{tpu_custom_call.1} parent=0
    _
  %s8 = ssub.s32 1, %s6
  %s9 = scalar_select 0, %s8, %s6
  $region1: #{tpu_custom_call.1} parent=0
    #allocation2 [shape = 'u8[4096]{0}', space=vmem, size = 0x1000, scoped, tag = 'input window, operand 0, single buffered']
    #allocation3 [shape = 's32[1]{0}', space=sflag, size = 0x4, scoped, tag = 'scoped memory for tpu_custom_call.1']
    #allocation4 [shape = 's32[1]{0}', space=sflag, size = 0x4, scoped, tag = 'scoped memory for tpu_custom_call.1']
    #allocation5 [shape = 'u8[4096]{0}', space=vmem, size = 0x1000, scoped, tag = 'input window, operand 1, single buffered']
    #allocation6 [shape = 's32[1]{0}', space=sflag, size = 0x4, scoped, tag = 'scoped memory for tpu_custom_call.1']
    #allocation7 [shape = 'u8[65536]{0}', space=vmem, size = 0x10000, scoped, tag = 'input window, operand 3, single buffered']
    #allocation8 [shape = 'u8[4096]{0}', space=vmem, size = 0x1000, scoped, tag = 'output window, operand 0, single buffered']
    %10 = vsyncpa [#allocation3], 0
    %11 = vsyncpa [#allocation6], 0
    %12 = vsyncpa [#allocation4], 0
    // Predicated region
    $region2: #{tpu_custom_call.1} parent=1 // pred_check
      _
    $region3: #{tpu_custom_call.1} parent=1 // pred_check_branch
      %14 = sbr.rel (0) target = $region5
    $region4: #{tpu_custom_call.1} parent=1 // pred_region
      %16 = vsyncadd [#allocation3], 0
      %s18 = sshll.u32 %s0, 4
      %s19 = int_to_ptr.hbm [resolvable:$true] %s18
      %s20 = sshll.u32 [#allocation2], 4
      %s21 = int_to_ptr.vmem [resolvable:$true] %s20
      %23 = dma.hbm_to_vmem [thread:$0]  %s19, 128, %s21, [#allocation3]
    $region5: #{tpu_custom_call.1} parent=1 // pred_fallthru
      _
    // Predicated region
    $region6: #{tpu_custom_call.1} parent=1 // pred_check
      _
    $region7: #{tpu_custom_call.1} parent=1 // pred_check_branch
      %25 = sbr.rel (0) target = $region9
    $region8: #{tpu_custom_call.1} parent=1 // pred_region
      %27 = vsyncadd [#allocation6], 0
      %s29 = sshll.u32 %s1, 4
      %s30 = int_to_ptr.hbm [resolvable:$true] %s29
      %s31 = sshll.u32 [#allocation5], 4
      %s32 = int_to_ptr.vmem [resolvable:$true] %s31
      %34 = dma.hbm_to_vmem [thread:$0]  %s30, 128, %s32, [#allocation6]
    $region9: #{tpu_custom_call.1} parent=1 // pred_fallthru
      _
    // Predicated region
    $region10: #{tpu_custom_call.1} parent=1 // pred_check
      _
    $region11: #{tpu_custom_call.1} parent=1 // pred_check_branch
      %36 = sbr.rel (0) target = $region13
    $region12: #{tpu_custom_call.1} parent=1 // pred_region
      _
    $region13: #{tpu_custom_call.1} parent=1 // pred_fallthru
      _
    // Predicated region
    $region14: #{tpu_custom_call.1} parent=1 // pred_check
      _
    $region15: #{tpu_custom_call.1} parent=1 // pred_check_branch
      %38 = sbr.rel (0) target = $region17
    $region16: #{tpu_custom_call.1} parent=1 // pred_region
      %40 = vsyncadd [#allocation6], 0
      %s41 = sshll.u32 %s3, 4
      %s42 = int_to_ptr.hbm [resolvable:$true] %s41
      %s43 = sshll.u32 [#allocation7], 4
      %s44 = int_to_ptr.vmem [resolvable:$true] %s43
      %49 = dma.hbm_to_vmem [thread:$0]  %s42, 2048, %s44, [#allocation6], 128, 128, 8
    $region17: #{tpu_custom_call.1} parent=1 // pred_fallthru
      _
    // Predicated region
    $region18: #{tpu_custom_call.1} parent=1 // pred_check
      _
    $region19: #{tpu_custom_call.1} parent=1 // pred_check_branch
      %51 = sbr.rel (0) target = $region21
    $region20: #{tpu_custom_call.1} parent=1 // pred_region
      _
    $region21: #{tpu_custom_call.1} parent=1 // pred_fallthru
      _
    // Predicated region
    $region22: #{tpu_custom_call.1} parent=1 // pred_check
      _
    $region23: #{tpu_custom_call.1} parent=1 // pred_check_branch
      %53 = sbr.rel (0) target = $region25
    $region24: #{tpu_custom_call.1} parent=1 // pred_region
      %55 = dma.done [#allocation3], 128
    $region25: #{tpu_custom_call.1} parent=1 // pred_fallthru
      _
    // Predicated region
    $region26: #{tpu_custom_call.1} parent=1 // pred_check
      _
    $region27: #{tpu_custom_call.1} parent=1 // pred_check_branch
      %57 = sbr.rel (0) target = $region29
    $region28: #{tpu_custom_call.1} parent=1 // pred_region
      %59 = dma.done [#allocation6], 128
    $region29: #{tpu_custom_call.1} parent=1 // pred_fallthru
      _
    // Predicated region
    $region30: #{tpu_custom_call.1} parent=1 // pred_check
      _
    $region31: #{tpu_custom_call.1} parent=1 // pred_check_branch
      %61 = sbr.rel (0) target = $region33
    $region32: #{tpu_custom_call.1} parent=1 // pred_region
      %63 = dma.done [#allocation6], 2048
    $region33: #{tpu_custom_call.1} parent=1 // pred_fallthru
      _
    %v64 = vld [vmem:[#allocation2] sm:$0xff]
    %v65 = vld [vmem:[#allocation5] sm:$0xff]
    %v66 = vld [vmem:[%s2] sm:$0x1]
    %v68 = vperm.slane %v66, 0
    %vm70 = vcmask 64512
    %v72 = vsel %vm70, %v64, 0
    %74 = vmatpush.msra.mxu0 0.0
    %75 = vmatpush.msra.mxu0 0.0
    %76 = vmatpush.msra.mxu0 0.0
    %77 = vmatpush.msra.mxu0 0.0
    %78 = vmatpush.msra.mxu0 0.0
    %79 = vmatpush.msra.mxu0 0.0
    %80 = vmatpush.msra.mxu0 0.0
    %81 = vmatpush.msra.mxu0 0.0
    %82 = vmatpush.msra.mxu0 0.0
    %83 = vmatpush.msra.mxu0 0.0
    %84 = vmatpush.msra.mxu0 0.0
    %85 = vmatpush.msra.mxu0 0.0
    %86 = vmatpush.msra.mxu0 0.0
    %87 = vmatpush.msra.mxu0 0.0
    %88 = vmatpush.msra.mxu0 0.0
    %89 = vmatpush.msra.mxu0 %v65
    %90 = vmatmul.f32.gmra.mxu0 %v72
    %v91 = vpop.f32.mrf.mxu0
    %v92 = vadd.f32 %v68, %v91
    %93 = vdwg.mxu0
    %v94 = vmax.f32 %v92, 0.0
    %v95 = vld [vmem:[#allocation7] sm:$0xff]
    %v96 = vld [vmem:[#allocation7 + $0x8] sm:$0xff]
    %v97 = vld [vmem:[#allocation7 + $0x10] sm:$0xff]
    %v98 = vld [vmem:[#allocation7 + $0x18] sm:$0xff]
    %v99 = vld [vmem:[#allocation7 + $0x20] sm:$0xff]
    %v100 = vld [vmem:[#allocation7 + $0x28] sm:$0xff]
    %v101 = vld [vmem:[#allocation7 + $0x30] sm:$0xff]
    %v102 = vld [vmem:[#allocation7 + $0x38] sm:$0xff]
    %v103 = vld [vmem:[#allocation7 + $0x40] sm:$0xff]
    %v104 = vld [vmem:[#allocation7 + $0x48] sm:$0xff]
    %v105 = vld [vmem:[#allocation7 + $0x50] sm:$0xff]
    %v106 = vld [vmem:[#allocation7 + $0x58] sm:$0xff]
    %v107 = vld [vmem:[#allocation7 + $0x60] sm:$0xff]
    %v108 = vld [vmem:[#allocation7 + $0x68] sm:$0xff]
    %v109 = vld [vmem:[#allocation7 + $0x70] sm:$0xff]
    %v110 = vld [vmem:[#allocation7 + $0x78] sm:$0xff]
    %v111 = vld [vmem:[%s4] sm:$0x1]
    %v113 = vperm.slane %v111, 0
    %115 = vmatpush.msra.mxu0 %v110
    %116 = vmatpush.msra.mxu0 %v109
    %117 = vmatpush.msra.mxu0 %v108
    %118 = vmatpush.msra.mxu0 %v107
    %119 = vmatpush.msra.mxu0 %v106
    %120 = vmatpush.msra.mxu0 %v105
    %121 = vmatpush.msra.mxu0 %v104
    %122 = vmatpush.msra.mxu0 %v103
    %123 = vmatpush.msra.mxu0 %v102
    %124 = vmatpush.msra.mxu0 %v101
    %125 = vmatpush.msra.mxu0 %v100
    %126 = vmatpush.msra.mxu0 %v99
    %127 = vmatpush.msra.mxu0 %v98
    %128 = vmatpush.msra.mxu0 %v97
    %129 = vmatpush.msra.mxu0 %v96
    %130 = vmatpush.msra.mxu0 %v95
    %131 = vmatmul.f32.gmra.mxu0 %v94
    %v132 = vpop.f32.mrf.mxu0
    %v133 = vadd.f32 %v113, %v132
    %134 = vdwg.mxu0
    %135 = vst [vmem:[#allocation8] sm:$0xff] %v133
    // Predicated region
    $region34: #{tpu_custom_call.1} parent=1 // pred_check
      _
    $region35: #{tpu_custom_call.1} parent=1 // pred_check_branch
      %137 = sbr.rel (0) target = $region37
    $region36: #{tpu_custom_call.1} parent=1 // pred_region
      %139 = vsyncadd [#allocation4], 0
      %s141 = sshll.u32 [#allocation8], 4
      %s142 = int_to_ptr.vmem [resolvable:$true] %s141
      %s143 = sshll.u32 %s5, 4
      %s144 = int_to_ptr.hbm [resolvable:$true] %s143
      %146 = dma.vmem_to_hbm [thread:$0]  %s142, 128, %s144, [#allocation4]
    $region37: #{tpu_custom_call.1} parent=1 // pred_fallthru
      _
    // Predicated region
    $region38: #{tpu_custom_call.1} parent=1 // pred_check
      _
    $region39: #{tpu_custom_call.1} parent=1 // pred_check_branch
      %148 = sbr.rel (0) target = $region41
    $region40: #{tpu_custom_call.1} parent=1 // pred_region
      %150 = dma.done [#allocation4], 128
    $region41: #{tpu_custom_call.1} parent=1 // pred_fallthru
      _
    %151 = vsyncpa [#allocation3], 1
    %152 = vsyncpa [#allocation6], 1
    %153 = vsyncpa [#allocation4], 1

</llo_original>
